<compile_context>
chip_gen: v7x
topology: tpu7x:2x2x1
jax: 0.10.0
libtpu: 0.0.40
codegen_flags: <defaults>
</compile_context>

<pallas_src>
import functools

import jax
import jax.numpy as jnp
from jax.experimental import pallas as pl
from jax.experimental.pallas import tpu as pltpu

H1, H2, HS = 512, 256, 512   # feature widths; HS = fused value|advantage hidden width
SUBLANE_BF16 = 16            # minimum sublane tile for bf16 operands

_WEIGHT_KEYS = ("w1", "b1", "w2", "b2", "wva", "bva", "wq", "bq")


def dueling_dqn_kernel(x_ref,
                       w1_ref, b1_ref,
                       w2_ref, b2_ref,
                       wva_ref, bva_ref,
                       wq_ref, bq_ref,
                       q_ref):
    f32, bf16 = jnp.float32, jnp.bfloat16

    def dense_relu(h_bf16, w_ref, b_ref):
        # bf16 MXU operands, f32 accumulate + bias + ReLU on the VPU, then back to bf16
        # once so the activation temporaries stay half-width in VMEM.
        y = jnp.dot(h_bf16, w_ref[...], preferred_element_type=f32) + b_ref[...]
        return jnp.maximum(y, 0.0).astype(bf16)

    # feature extractor: Linear(D_in,512)+ReLU+Dropout, Linear(512,256)+ReLU+Dropout
    # TODO(synk): nn.Dropout(0.3) implemented as eval-mode identity (inference semantics).
    h1 = dense_relu(x_ref[...], w1_ref, b1_ref)
    h2 = dense_relu(h1, w2_ref, b2_ref)

    # fused value|advantage hidden layer: one (256, 512) matmul instead of two 256-wide ones
    hva = dense_relu(h2, wva_ref, bva_ref)

    # fused dueling head: q = v + a - mean_A(a) pre-folded into (wq, bq) by the wrapper.
    # N = n_actions, so only the real action columns are computed and written back.
    q = jnp.dot(hva, wq_ref[...], preferred_element_type=f32) + bq_ref[...]
    q_ref[...] = q.astype(q_ref.dtype)


def prepare_fused_params(p, n_actions):
    """One-time weight preprocessing: fuse streams, fold dueling combine, cast to bf16."""
    A = n_actions
    f32, bf16 = jnp.float32, jnp.bfloat16

    # fuse value|advantage hidden layers into one (256, 512) weight / (1, 512) bias
    wva = jnp.concatenate([p["wv1"], p["wa1"]], axis=1)
    bva = jnp.concatenate([p["bv1"], p["ba1"]], axis=1)

    # fold q = v + a - mean_A(a) into a single (HS, A) head weight / (1, A) bias.
    # The mean is over the REAL A advantage columns; no lane padding anywhere.
    wq_v = jnp.broadcast_to(p["wv2"], (H2, A))                    # +v to every action column
    wq_a = p["wa2"] - jnp.mean(p["wa2"], axis=1, keepdims=True)   # a - mean(a), weight part
    wq = jnp.concatenate([wq_v, wq_a], axis=0)
    bq = p["bv2"] + p["ba2"] - jnp.mean(p["ba2"], axis=1, keepdims=True)

    return dict(
        w1=p["w1"].astype(bf16), b1=p["b1"].astype(f32),
        w2=p["w2"].astype(bf16), b2=p["b2"].astype(f32),
        wva=wva.astype(bf16), bva=bva.astype(f32),
        wq=wq.astype(bf16), bq=bq.astype(f32),
    )


def _vmem_limit_bytes(tile_b, d_in, a_out, weight_bytes):
    """Scoped-VMEM request sized from the real per-tile buffers (+2x headroom)."""
    x_tiles = 2 * tile_b * d_in * 2                     # double-buffered bf16 x tiles
    q_tiles = 2 * tile_b * max(a_out, 128) * 4          # out tiles (lane-padded inside VMEM)
    acts = tile_b * (H1 + H2 + HS) * (4 + 2)            # f32 matmul results + bf16 copies
    est = x_tiles + q_tiles + 2 * weight_bytes + acts   # weights double-buffered (worst case)
    return int(min(64 << 20, max(16 << 20, 2 * est)))   # cap at v7x physical 64 MiB


@functools.partial(jax.jit, static_argnames=("n_actions", "tile_b"))
def dueling_dqn_forward(x, fused, *, n_actions, tile_b=1024):
    """Batch-tiled forward; weights stay VMEM-resident across grid steps."""
    B, d_in = x.shape
    A = n_actions

    # bf16 x needs a sublane multiple of 16.  Small batches -> single grid step; once the
    # batch allows it, prefer >=2 "parallel" steps so v7x megacore uses both TensorCores.
    b_min = pl.cdiv(B, SUBLANE_BF16) * SUBLANE_BF16
    if b_min < 2 * SUBLANE_BF16:
        max_tile = b_min
    else:
        max_tile = pl.cdiv(b_min // 2, SUBLANE_BF16) * SUBLANE_BF16
    tile_b = max(SUBLANE_BF16, min(tile_b, 1024, max_tile))
    tile_b = (tile_b // SUBLANE_BF16) * SUBLANE_BF16
    b_pad = pl.cdiv(B, tile_b) * tile_b

    # ship x as bf16, unpadded on the feature axis (D_in == full last dim -> legal block)
    x_bf16 = x.astype(jnp.bfloat16)
    if b_pad != B:
        x_bf16 = jnp.zeros((b_pad, d_in), jnp.bfloat16).at[:B, :].set(x_bf16)

    grid = (b_pad // tile_b,)
    row_tile = lambda i: (i, 0)
    pinned = lambda i: (0, 0)   # constant block -> weights DMA'd once, stay VMEM-resident

    in_specs = [pl.BlockSpec((tile_b, d_in), row_tile)]
    in_specs += [pl.BlockSpec(fused[k].shape, pinned) for k in _WEIGHT_KEYS]
    out_specs = pl.BlockSpec((tile_b, A), row_tile)

    weight_bytes = sum(int(fused[k].size) * fused[k].dtype.itemsize for k in _WEIGHT_KEYS)
    flops = 2 * b_pad * (d_in * H1 + H1 * H2 + H2 * HS + HS * A)
    bytes_accessed = b_pad * d_in * 2 + b_pad * A * 4 + weight_bytes

    q_pad = pl.pallas_call(
        dueling_dqn_kernel,
        out_shape=jax.ShapeDtypeStruct((b_pad, A), jnp.float32),
        grid=grid,
        in_specs=in_specs,
        out_specs=out_specs,
        compiler_params=pltpu.CompilerParams(
            dimension_semantics=("parallel",),
            vmem_limit_bytes=_vmem_limit_bytes(tile_b, d_in, A, weight_bytes)),
        cost_estimate=pl.CostEstimate(
            flops=flops, transcendentals=0, bytes_accessed=bytes_accessed),
    )(x_bf16, *(fused[k] for k in _WEIGHT_KEYS))

    return q_pad if b_pad == B else q_pad[:B]


def init_linear(key, fan_in, fan_out):
    """Deterministic PyTorch-style nn.Linear init: U(-1/sqrt(fan_in), 1/sqrt(fan_in))."""
    kw, kb = jax.random.split(key)
    bound = 1.0 / (fan_in ** 0.5)
    w = jax.random.uniform(kw, (fan_in, fan_out), jnp.float32, -bound, bound)
    b = jax.random.uniform(kb, (1, fan_out), jnp.float32, -bound, bound)
    return w, b


def make_params(key, d_in, n_actions):
    ks = jax.random.split(key, 6)
    p = {}
    p["w1"], p["b1"] = init_linear(ks[0], d_in, H1)          # features Linear 1
    p["w2"], p["b2"] = init_linear(ks[1], H1, H2)            # features Linear 2
    p["wv1"], p["bv1"] = init_linear(ks[2], H2, 256)         # value stream Linear 1
    p["wv2"], p["bv2"] = init_linear(ks[3], 256, 1)          # value stream Linear 2
    p["wa1"], p["ba1"] = init_linear(ks[4], H2, 256)         # advantage stream Linear 1
    p["wa2"], p["ba2"] = init_linear(ks[5], 256, n_actions)  # advantage stream Linear 2
    return p


def ref_forward(x, p):
    """Plain-JAX f32 reference of the PyTorch forward (eval mode, unfused)."""
    h1 = jax.nn.relu(x @ p["w1"] + p["b1"])
    h2 = jax.nn.relu(h1 @ p["w2"] + p["b2"])
    v = jax.nn.relu(h2 @ p["wv1"] + p["bv1"]) @ p["wv2"] + p["bv2"]
    a = jax.nn.relu(h2 @ p["wa1"] + p["ba1"]) @ p["wa2"] + p["ba2"]
    return v + a - a.mean(axis=1, keepdims=True)


if __name__ == "__main__":
    B, D_IN, N_ACTIONS = 16, 32, 8

    key = jax.random.PRNGKey(0)
    k_x, k_p = jax.random.split(key)
    x = jax.random.normal(k_x, (B, D_IN), dtype=jnp.float32)
    params = make_params(k_p, D_IN, N_ACTIONS)
    fused = prepare_fused_params(params, N_ACTIONS)   # one-time preprocessing, not per step

    # tile_b defaults to 1024 and is clamped to the batch -> the demo runs ONE grid step.
    q = jax.block_until_ready(dueling_dqn_forward(x, fused, n_actions=N_ACTIONS))
    q_ref = jax.block_until_ready(ref_forward(x, params))

    assert q.shape == (B, N_ACTIONS), q.shape
    # bf16 weights / matmul operands vs. f32 reference => modest tolerance.
    err = float(jnp.max(jnp.abs(q - q_ref)))
    assert jnp.allclose(q, q_ref, rtol=2e-2, atol=2e-2), f"max abs err {err}"
    print("KERNEL_OK")
</pallas_src>

<mosaic_0001>
module attributes {stable_mosaic.version = 11 : i64} {
  func.func @dueling_dqn_kernel(%arg0: i32, %arg1: memref<16x32xbf16, #tpu.memory_space<vmem>>, %arg2: memref<32x512xbf16, #tpu.memory_space<vmem>>, %arg3: memref<1x512xf32, #tpu.memory_space<vmem>>, %arg4: memref<512x256xbf16, #tpu.memory_space<vmem>>, %arg5: memref<1x256xf32, #tpu.memory_space<vmem>>, %arg6: memref<256x512xbf16, #tpu.memory_space<vmem>>, %arg7: memref<1x512xf32, #tpu.memory_space<vmem>>, %arg8: memref<512x8xbf16, #tpu.memory_space<vmem>>, %arg9: memref<1x8xf32, #tpu.memory_space<vmem>>, %arg10: memref<16x8xf32, #tpu.memory_space<vmem>>) attributes {dimension_semantics = [#tpu.dimension_semantics<parallel>], iteration_bounds = array<i64: 1>, scalar_prefetch = 0 : i64, scratch_operands = 0 : i64, tpu.core_type = #tpu.core_type<tc>, window_params = [{transform_indices = @transform_0, window_bounds = array<i64: 16, 32>}, {pipeline_mode = #tpu.pipeline_mode<synchronous>, transform_indices = @transform_1, window_bounds = array<i64: 32, 512>}, {pipeline_mode = #tpu.pipeline_mode<synchronous>, transform_indices = @transform_2, window_bounds = array<i64: 1, 512>}, {pipeline_mode = #tpu.pipeline_mode<synchronous>, transform_indices = @transform_3, window_bounds = array<i64: 512, 256>}, {pipeline_mode = #tpu.pipeline_mode<synchronous>, transform_indices = @transform_4, window_bounds = array<i64: 1, 256>}, {pipeline_mode = #tpu.pipeline_mode<synchronous>, transform_indices = @transform_5, window_bounds = array<i64: 256, 512>}, {pipeline_mode = #tpu.pipeline_mode<synchronous>, transform_indices = @transform_6, window_bounds = array<i64: 1, 512>}, {pipeline_mode = #tpu.pipeline_mode<synchronous>, transform_indices = @transform_7, window_bounds = array<i64: 512, 8>}, {pipeline_mode = #tpu.pipeline_mode<synchronous>, transform_indices = @transform_8, window_bounds = array<i64: 1, 8>}, {transform_indices = @transform_9, window_bounds = array<i64: 16, 8>}]} {
    %c0 = arith.constant 0 : index
    %c0_0 = arith.constant 0 : index
    %0 = vector.load %arg1[%c0, %c0_0] : memref<16x32xbf16, #tpu.memory_space<vmem>>, vector<16x32xbf16>
    %c0_1 = arith.constant 0 : index
    %c0_2 = arith.constant 0 : index
    %1 = vector.load %arg2[%c0_1, %c0_2] : memref<32x512xbf16, #tpu.memory_space<vmem>>, vector<32x512xbf16>
    %cst = arith.constant dense<0.000000e+00> : vector<16x512xf32>
    %2 = tpu.matmul %0, %1, %cst {dimension_numbers = #tpu.dot_dimension_numbers<[1], [0], [0], [1], [0, 0, 1, 1], [], []>} : vector<16x32xbf16>, vector<32x512xbf16>, vector<16x512xf32> -> vector<16x512xf32>
    %c0_3 = arith.constant 0 : index
    %c0_4 = arith.constant 0 : index
    %3 = vector.load %arg3[%c0_3, %c0_4] : memref<1x512xf32, #tpu.memory_space<vmem>>, vector<1x512xf32>
    %4 = vector.broadcast %3 : vector<1x512xf32> to vector<16x512xf32>
    %5 = arith.addf %2, %4 : vector<16x512xf32>
    %cst_5 = arith.constant 0.000000e+00 : f32
    %6 = vector.broadcast %cst_5 : f32 to vector<16x512xf32>
    %7 = arith.maximumf %5, %6 : vector<16x512xf32>
    %8 = arith.truncf %7 : vector<16x512xf32> to vector<16x512xbf16>
    %c0_6 = arith.constant 0 : index
    %c0_7 = arith.constant 0 : index
    %9 = vector.load %arg4[%c0_6, %c0_7] : memref<512x256xbf16, #tpu.memory_space<vmem>>, vector<512x256xbf16>
    %cst_8 = arith.constant dense<0.000000e+00> : vector<16x256xf32>
    %10 = tpu.matmul %8, %9, %cst_8 {dimension_numbers = #tpu.dot_dimension_numbers<[1], [0], [0], [1], [0, 0, 1, 1], [], []>} : vector<16x512xbf16>, vector<512x256xbf16>, vector<16x256xf32> -> vector<16x256xf32>
    %c0_9 = arith.constant 0 : index
    %c0_10 = arith.constant 0 : index
    %11 = vector.load %arg5[%c0_9, %c0_10] : memref<1x256xf32, #tpu.memory_space<vmem>>, vector<1x256xf32>
    %12 = vector.broadcast %11 : vector<1x256xf32> to vector<16x256xf32>
    %13 = arith.addf %10, %12 : vector<16x256xf32>
    %cst_11 = arith.constant 0.000000e+00 : f32
    %14 = vector.broadcast %cst_11 : f32 to vector<16x256xf32>
    %15 = arith.maximumf %13, %14 : vector<16x256xf32>
    %16 = arith.truncf %15 : vector<16x256xf32> to vector<16x256xbf16>
    %c0_12 = arith.constant 0 : index
    %c0_13 = arith.constant 0 : index
    %17 = vector.load %arg6[%c0_12, %c0_13] : memref<256x512xbf16, #tpu.memory_space<vmem>>, vector<256x512xbf16>
    %cst_14 = arith.constant dense<0.000000e+00> : vector<16x512xf32>
    %18 = tpu.matmul %16, %17, %cst_14 {dimension_numbers = #tpu.dot_dimension_numbers<[1], [0], [0], [1], [0, 0, 1, 1], [], []>} : vector<16x256xbf16>, vector<256x512xbf16>, vector<16x512xf32> -> vector<16x512xf32>
    %c0_15 = arith.constant 0 : index
    %c0_16 = arith.constant 0 : index
    %19 = vector.load %arg7[%c0_15, %c0_16] : memref<1x512xf32, #tpu.memory_space<vmem>>, vector<1x512xf32>
    %20 = vector.broadcast %19 : vector<1x512xf32> to vector<16x512xf32>
    %21 = arith.addf %18, %20 : vector<16x512xf32>
    %cst_17 = arith.constant 0.000000e+00 : f32
    %22 = vector.broadcast %cst_17 : f32 to vector<16x512xf32>
    %23 = arith.maximumf %21, %22 : vector<16x512xf32>
    %24 = arith.truncf %23 : vector<16x512xf32> to vector<16x512xbf16>
    %c0_18 = arith.constant 0 : index
    %c0_19 = arith.constant 0 : index
    %25 = vector.load %arg8[%c0_18, %c0_19] : memref<512x8xbf16, #tpu.memory_space<vmem>>, vector<512x8xbf16>
    %cst_20 = arith.constant dense<0.000000e+00> : vector<16x8xf32>
    %26 = tpu.matmul %24, %25, %cst_20 {dimension_numbers = #tpu.dot_dimension_numbers<[1], [0], [0], [1], [0, 0, 1, 1], [], []>} : vector<16x512xbf16>, vector<512x8xbf16>, vector<16x8xf32> -> vector<16x8xf32>
    %c0_21 = arith.constant 0 : index
    %c0_22 = arith.constant 0 : index
    %27 = vector.load %arg9[%c0_21, %c0_22] : memref<1x8xf32, #tpu.memory_space<vmem>>, vector<1x8xf32>
    %28 = vector.broadcast %27 : vector<1x8xf32> to vector<16x8xf32>
    %29 = arith.addf %26, %28 : vector<16x8xf32>
    %c0_23 = arith.constant 0 : index
    %c0_24 = arith.constant 0 : index
    %30 = vector.load %arg10[%c0_23, %c0_24] : memref<16x8xf32, #tpu.memory_space<vmem>>, vector<16x8xf32>
    tpu.vector_store %arg10[%c0_23, %c0_24], %29 {strides = array<i32>} : memref<16x8xf32, #tpu.memory_space<vmem>>, vector<16x8xf32>,
    return
  }
  func.func @transform_0(%arg0: i32) -> (i32, i32) {
    %c0_i32 = arith.constant 0 : i32
    %c0_i32_0 = arith.constant 0 : i32
    return %arg0, %c0_i32 : i32, i32
  }
  func.func @transform_1(%arg0: i32) -> (i32, i32) {
    %c0_i32 = arith.constant 0 : i32
    %c0_i32_0 = arith.constant 0 : i32
    %c0_i32_1 = arith.constant 0 : i32
    return %c0_i32, %c0_i32_0 : i32, i32
  }
  func.func @transform_2(%arg0: i32) -> (i32, i32) {
    %c0_i32 = arith.constant 0 : i32
    %c0_i32_0 = arith.constant 0 : i32
    %c0_i32_1 = arith.constant 0 : i32
    return %c0_i32, %c0_i32_0 : i32, i32
  }
  func.func @transform_3(%arg0: i32) -> (i32, i32) {
    %c0_i32 = arith.constant 0 : i32
    %c0_i32_0 = arith.constant 0 : i32
    %c0_i32_1 = arith.constant 0 : i32
    return %c0_i32, %c0_i32_0 : i32, i32
  }
  func.func @transform_4(%arg0: i32) -> (i32, i32) {
    %c0_i32 = arith.constant 0 : i32
    %c0_i32_0 = arith.constant 0 : i32
    %c0_i32_1 = arith.constant 0 : i32
    return %c0_i32, %c0_i32_0 : i32, i32
  }
  func.func @transform_5(%arg0: i32) -> (i32, i32) {
    %c0_i32 = arith.constant 0 : i32
    %c0_i32_0 = arith.constant 0 : i32
    %c0_i32_1 = arith.constant 0 : i32
    return %c0_i32, %c0_i32_0 : i32, i32
  }
  func.func @transform_6(%arg0: i32) -> (i32, i32) {
    %c0_i32 = arith.constant 0 : i32
    %c0_i32_0 = arith.constant 0 : i32
    %c0_i32_1 = arith.constant 0 : i32
    return %c0_i32, %c0_i32_0 : i32, i32
  }
  func.func @transform_7(%arg0: i32) -> (i32, i32) {
    %c0_i32 = arith.constant 0 : i32
    %c0_i32_0 = arith.constant 0 : i32
    %c0_i32_1 = arith.constant 0 : i32
    return %c0_i32, %c0_i32_0 : i32, i32
  }
  func.func @transform_8(%arg0: i32) -> (i32, i32) {
    %c0_i32 = arith.constant 0 : i32
    %c0_i32_0 = arith.constant 0 : i32
    %c0_i32_1 = arith.constant 0 : i32
    return %c0_i32, %c0_i32_0 : i32, i32
  }
  func.func @transform_9(%arg0: i32) -> (i32, i32) {
    %c0_i32 = arith.constant 0 : i32
    %c0_i32_0 = arith.constant 0 : i32
    return %arg0, %c0_i32 : i32, i32
  }
}

</mosaic_0001>

<llo_original>
// kernel: dueling_dqn_forward.1
$region0: #{dueling_dqn_forward.1}
  #allocation0 [shape = 'u32[]', space=smem, size = 0x4, offset = 0x4, fixed_abs, tag = 'smem constant byte address 0x4 - core index']
  #allocation1 [shape = 'u32[144,128]{1,0:T(1,128)}', space=vmem, size = 0x12000, scoped, tag = 'internal scratch']
  %s0 = inlined_call_operand.vmem [shape: bf16[16,32], index: 0, kind: input, shape index: {}]
  %s1 = inlined_call_operand.vmem [shape: bf16[32,512], index: 1, kind: input, shape index: {}]
  %s2 = inlined_call_operand.vmem [shape: f32[1,512], index: 2, kind: input, shape index: {}]
  %s3 = inlined_call_operand.hbm [shape: bf16[512,256], index: 3, kind: input, shape index: {}]
  %s4 = inlined_call_operand.vmem [shape: f32[1,256], index: 4, kind: input, shape index: {}]
  %s5 = inlined_call_operand.hbm [shape: bf16[256,512], index: 5, kind: input, shape index: {}]
  %s6 = inlined_call_operand.vmem [shape: f32[1,512], index: 6, kind: input, shape index: {}]
  %s7 = inlined_call_operand.vmem [shape: bf16[512,8], index: 7, kind: input, shape index: {}]
  %s8 = inlined_call_operand.vmem [shape: f32[1,8], index: 8, kind: input, shape index: {}]
  %s9 = inlined_call_operand.vmem [shape: f32[16,8], index: 9, kind: output, shape index: {}]
  %s10 = sld [smem:[#allocation0]]
  $region54: #{dueling_dqn_forward.1} parent=0
    _
  %s12 = ssub.s32 1, %s10
  %s13 = scalar_select 0, %s12, %s10
  $region1: #{dueling_dqn_forward.1} parent=0
    #allocation2 [shape = 'u8[262144]{0}', space=vmem, size = 0x40000, scoped, tag = 'input window, operand 3, single buffered']
    #allocation3 [shape = 's32[1]{0}', space=sflag, size = 0x4, scoped, tag = 'scoped memory for dueling_dqn_forward.1']
    #allocation4 [shape = 'u8[262144]{0}', space=vmem, size = 0x40000, scoped, tag = 'input window, operand 5, single buffered']
    #allocation5 [shape = 's32[1]{0}', space=sflag, size = 0x4, scoped, tag = 'scoped memory for dueling_dqn_forward.1']
    %14 = vsyncpa [#allocation3], 0
    %15 = vsyncpa [#allocation5], 0
    // Predicated region
    $region2: #{dueling_dqn_forward.1} parent=1 // pred_check
      _
    $region3: #{dueling_dqn_forward.1} parent=1 // pred_check_branch
      %17 = sbr.rel (0) target = $region5
    $region4: #{dueling_dqn_forward.1} parent=1 // pred_region
      _
    $region5: #{dueling_dqn_forward.1} parent=1 // pred_fallthru
      _
    // Predicated region
    $region6: #{dueling_dqn_forward.1} parent=1 // pred_check
      _
    $region7: #{dueling_dqn_forward.1} parent=1 // pred_check_branch
      %19 = sbr.rel (0) target = $region9
    $region8: #{dueling_dqn_forward.1} parent=1 // pred_region
      _
    $region9: #{dueling_dqn_forward.1} parent=1 // pred_fallthru
      _
    // Predicated region
    $region10: #{dueling_dqn_forward.1} parent=1 // pred_check
      _
    $region11: #{dueling_dqn_forward.1} parent=1 // pred_check_branch
      %21 = sbr.rel (0) target = $region13
    $region12: #{dueling_dqn_forward.1} parent=1 // pred_region
      _
    $region13: #{dueling_dqn_forward.1} parent=1 // pred_fallthru
      _
    // Predicated region
    $region14: #{dueling_dqn_forward.1} parent=1 // pred_check
      _
    $region15: #{dueling_dqn_forward.1} parent=1 // pred_check_branch
      %23 = sbr.rel (0) target = $region17
    $region16: #{dueling_dqn_forward.1} parent=1 // pred_region
      %s25 = ssub.s32 8192, 8192
      %26 = vsyncadd [#allocation3], %s25
      %s27 = sshll.u32 [#allocation2], 4
      %s28 = int_to_ptr.vmem [resolvable:$true] %s27
      %33 = dma.hbm_to_vmem [thread:$0]  %s3, 8192, %s28, [#allocation3], 128, 128, 8
    $region17: #{dueling_dqn_forward.1} parent=1 // pred_fallthru
      _
    // Predicated region
    $region18: #{dueling_dqn_forward.1} parent=1 // pred_check
      _
    $region19: #{dueling_dqn_forward.1} parent=1 // pred_check_branch
      %35 = sbr.rel (0) target = $region21
    $region20: #{dueling_dqn_forward.1} parent=1 // pred_region
      _
    $region21: #{dueling_dqn_forward.1} parent=1 // pred_fallthru
      _
    // Predicated region
    $region22: #{dueling_dqn_forward.1} parent=1 // pred_check
      _
    $region23: #{dueling_dqn_forward.1} parent=1 // pred_check_branch
      %37 = sbr.rel (0) target = $region25
    $region24: #{dueling_dqn_forward.1} parent=1 // pred_region
      %s39 = ssub.s32 8192, 8192
      %40 = vsyncadd [#allocation5], %s39
      %s41 = sshll.u32 [#allocation4], 4
      %s42 = int_to_ptr.vmem [resolvable:$true] %s41
      %47 = dma.hbm_to_vmem [thread:$0]  %s5, 8192, %s42, [#allocation5], 256, 256, 16
    $region25: #{dueling_dqn_forward.1} parent=1 // pred_fallthru
      _
    // Predicated region
    $region26: #{dueling_dqn_forward.1} parent=1 // pred_check
      _
    $region27: #{dueling_dqn_forward.1} parent=1 // pred_check_branch
      %49 = sbr.rel (0) target = $region29
    $region28: #{dueling_dqn_forward.1} parent=1 // pred_region
      _
    $region29: #{dueling_dqn_forward.1} parent=1 // pred_fallthru
      _
    // Predicated region
    $region30: #{dueling_dqn_forward.1} parent=1 // pred_check
      _
    $region31: #{dueling_dqn_forward.1} parent=1 // pred_check_branch
      %51 = sbr.rel (0) target = $region33
    $region32: #{dueling_dqn_forward.1} parent=1 // pred_region
      _
    $region33: #{dueling_dqn_forward.1} parent=1 // pred_fallthru
      _
    // Predicated region
    $region34: #{dueling_dqn_forward.1} parent=1 // pred_check
      _
    $region35: #{dueling_dqn_forward.1} parent=1 // pred_check_branch
      %53 = sbr.rel (0) target = $region37
    $region36: #{dueling_dqn_forward.1} parent=1 // pred_region
      _
    $region37: #{dueling_dqn_forward.1} parent=1 // pred_fallthru
      _
    // Predicated region
    $region38: #{dueling_dqn_forward.1} parent=1 // pred_check
      _
    $region39: #{dueling_dqn_forward.1} parent=1 // pred_check_branch
      %55 = sbr.rel (0) target = $region41
    $region40: #{dueling_dqn_forward.1} parent=1 // pred_region
      %56 = dma.done [#allocation3], 8192
    $region41: #{dueling_dqn_forward.1} parent=1 // pred_fallthru
      _
    // Predicated region
    $region42: #{dueling_dqn_forward.1} parent=1 // pred_check
      _
    $region43: #{dueling_dqn_forward.1} parent=1 // pred_check_branch
      %58 = sbr.rel (0) target = $region45
    $region44: #{dueling_dqn_forward.1} parent=1 // pred_region
      %59 = dma.done [#allocation5], 8192
    $region45: #{dueling_dqn_forward.1} parent=1 // pred_fallthru
      _
    %v61 = vld [vmem:[%s0] sm:$0xf]
    %v62 = vld [vmem:[%s0 + $0x4] sm:$0xf]
    %v63 = vld [vmem:[%s1] sm:$0xff]
    %v64 = vld [vmem:[%s1 + $0x8] sm:$0xff]
    %v65 = vld [vmem:[%s1 + $0x10] sm:$0xff]
    %v66 = vld [vmem:[%s1 + $0x18] sm:$0xff]
    %v67 = vld [vmem:[%s1 + $0x20] sm:$0xff]
    %v68 = vld [vmem:[%s1 + $0x28] sm:$0xff]
    %v69 = vld [vmem:[%s1 + $0x30] sm:$0xff]
    %v70 = vld [vmem:[%s1 + $0x38] sm:$0xff]
    %v71 = vld [vmem:[%s2] sm:$0xf]
    %v73 = vlaneseq
    %v74 = vshrl.u32 %v73, 7
    %v75 = vsub.s32 0, %v74
    %v76 = vrot.slane %v71, %v75
    %v77 = vlaneseq
    %v78 = vshrl.u32 %v77, 7
    %v79 = vsub.s32 1, %v78
    %v80 = vrot.slane %v71, %v79
    %v81 = vlaneseq
    %v82 = vshrl.u32 %v81, 7
    %v83 = vsub.s32 2, %v82
    %v84 = vrot.slane %v71, %v83
    %v85 = vlaneseq
    %v86 = vshrl.u32 %v85, 7
    %v87 = vsub.s32 3, %v86
    %v88 = vrot.slane %v71, %v87
    %v95 = vunpack.c.l.b16 %v61
    %v96 = vunpack.c.l.b16 %v62
    %v97 = vpack.c.b16 %v96, %v95
    %v106 = vunpack.c.l.b16 %v63
    %v107 = vunpack.c.h.b16 %v63
    %v108 = vunpack.c.l.b16 %v64
    %v109 = vunpack.c.h.b16 %v64
    %v110 = vunpack.c.l.b16 %v65
    %v111 = vunpack.c.h.b16 %v65
    %v112 = vunpack.c.l.b16 %v66
    %v113 = vunpack.c.h.b16 %v66
    %v114 = vunpack.c.l.b16 %v67
    %v115 = vunpack.c.h.b16 %v67
    %v116 = vunpack.c.l.b16 %v68
    %v117 = vunpack.c.h.b16 %v68
    %v118 = vunpack.c.l.b16 %v69
    %v119 = vunpack.c.h.b16 %v69
    %v120 = vunpack.c.l.b16 %v70
    %v121 = vunpack.c.h.b16 %v70
    %v122 = vpack.c.b16 %v110, %v106
    %v123 = vpack.c.b16 %v111, %v107
    %v124 = vpack.c.b16 %v112, %v108
    %v125 = vpack.c.b16 %v113, %v109
    %v126 = vpack.c.b16 %v118, %v114
    %v127 = vpack.c.b16 %v119, %v115
    %v128 = vpack.c.b16 %v120, %v116
    %v129 = vpack.c.b16 %v121, %v117
    %vm138 = vcmask 261120
    %v140 = vsel %vm138, %v97, 0
    %142 = vmatprep.subr.bf16.mxu0 %v123
    %143 = vmatpush1.bf16.msra.mxu0 %v122
    %144 = vmatprep.subr.bf16.mxu0 %v127
    %145 = vmatpush1.bf16.msra.mxu0 %v126
    %146 = vmatprep.subr.bf16.mxu0 0
    %147 = vmatpush1.bf16.msra.mxu0 0
    %148 = vmatprep.subr.bf16.mxu0 0
    %149 = vmatpush1.bf16.msra.mxu0 0
    %150 = vmatprep.subr.bf16.mxu0 0
    %151 = vmatpush1.bf16.msra.mxu0 0
    %152 = vmatprep.subr.bf16.mxu0 0
    %153 = vmatpush1.bf16.msra.mxu0 0
    %154 = vmatprep.subr.bf16.mxu0 0
    %155 = vmatpush1.bf16.msra.mxu0 0
    %156 = vmatprep.subr.bf16.mxu0 0
    %157 = vmatpush1.bf16.msra.mxu0 0
    %158 = vmatprep.subr.bf16.mxu0 0
    %159 = vmatpush1.bf16.msra.mxu0 0
    %160 = vmatprep.subr.bf16.mxu0 0
    %161 = vmatpush1.bf16.msra.mxu0 0
    %162 = vmatprep.subr.bf16.mxu0 0
    %163 = vmatpush1.bf16.msra.mxu0 0
    %164 = vmatprep.subr.bf16.mxu0 0
    %165 = vmatpush1.bf16.msra.mxu0 0
    %166 = vmatprep.subr.bf16.mxu0 0
    %167 = vmatpush1.bf16.msra.mxu0 0
    %168 = vmatprep.subr.bf16.mxu0 0
    %169 = vmatpush1.bf16.msra.mxu0 0
    %170 = vmatprep.subr.bf16.mxu0 0
    %171 = vmatpush1.bf16.msra.mxu0 0
    %172 = vmatprep.subr.bf16.mxu0 0
    %173 = vmatpush1.bf16.msra.mxu0 0
    %174 = vmatprep.mubr.bf16.mxu0 0
    %175 = vmatmul.mubr.bf16.gmra.mrb[0].mxu0 %v140
    %v176 = vpop.f32.mrb[0].mxu0
    %v177 = vadd.f32 %v76, %v176
    %v178 = vpop.f32.mrb[0].mxu0
    %v179 = vadd.f32 %v80, %v178
    %v180 = vpop.f32.mrb[0].mxu0
    %v181 = vadd.f32 %v76, %v180
    %v182 = vpop.f32.mrb[0].mxu0
    %v183 = vadd.f32 %v80, %v182
    %184 = vdwg.mxu0
    %185 = vmatprep.subr.bf16.mxu0 %v125
    %186 = vmatpush1.bf16.msra.mxu0 %v124
    %187 = vmatprep.subr.bf16.mxu0 %v129
    %188 = vmatpush1.bf16.msra.mxu0 %v128
    %189 = vmatprep.subr.bf16.mxu0 0
    %190 = vmatpush1.bf16.msra.mxu0 0
    %191 = vmatprep.subr.bf16.mxu0 0
    %192 = vmatpush1.bf16.msra.mxu0 0
    %193 = vmatprep.subr.bf16.mxu0 0
    %194 = vmatpush1.bf16.msra.mxu0 0
    %195 = vmatprep.subr.bf16.mxu0 0
    %196 = vmatpush1.bf16.msra.mxu0 0
    %197 = vmatprep.subr.bf16.mxu0 0
    %198 = vmatpush1.bf16.msra.mxu0 0
    %199 = vmatprep.subr.bf16.mxu0 0
    %200 = vmatpush1.bf16.msra.mxu0 0
    %201 = vmatprep.subr.bf16.mxu0 0
    %202 = vmatpush1.bf16.msra.mxu0 0
    %203 = vmatprep.subr.bf16.mxu0 0
    %204 = vmatpush1.bf16.msra.mxu0 0
    %205 = vmatprep.subr.bf16.mxu0 0
    %206 = vmatpush1.bf16.msra.mxu0 0
    %207 = vmatprep.subr.bf16.mxu0 0
    %208 = vmatpush1.bf16.msra.mxu0 0
    %209 = vmatprep.subr.bf16.mxu0 0
    %210 = vmatpush1.bf16.msra.mxu0 0
    %211 = vmatprep.subr.bf16.mxu0 0
    %212 = vmatpush1.bf16.msra.mxu0 0
    %213 = vmatprep.subr.bf16.mxu0 0
    %214 = vmatpush1.bf16.msra.mxu0 0
    %215 = vmatprep.subr.bf16.mxu0 0
    %216 = vmatpush1.bf16.msra.mxu0 0
    %217 = vmatprep.mubr.bf16.mxu0 0
    %218 = vmatmul.mubr.bf16.gmra.mrb[0].mxu0 %v140
    %v219 = vpop.f32.mrb[0].mxu0
    %v220 = vadd.f32 %v84, %v219
    %v221 = vpop.f32.mrb[0].mxu0
    %v222 = vadd.f32 %v88, %v221
    %v223 = vpop.f32.mrb[0].mxu0
    %v224 = vadd.f32 %v84, %v223
    %v225 = vpop.f32.mrb[0].mxu0
    %v226 = vadd.f32 %v88, %v225
    %227 = vdwg.mxu0
    %v228 = vmax.f32 %v177, 0.0
    %v229 = vmax.f32 %v179, 0.0
    %v230 = vmax.f32 %v220, 0.0
    %v231 = vmax.f32 %v222, 0.0
    %v232 = vmax.f32 %v181, 0.0
    %v233 = vmax.f32 %v183, 0.0
    %v234 = vmax.f32 %v224, 0.0
    %v235 = vmax.f32 %v226, 0.0
    %v236 = vpack.c.bf16 %v232, %v228
    %v237 = vpack.c.bf16 %v233, %v229
    %v238 = vpack.c.bf16 %v234, %v230
    %v239 = vpack.c.bf16 %v235, %v231
    %v240 = vld [vmem:[#allocation2] sm:$0xff]
    %v241 = vld [vmem:[#allocation2 + $0x8] sm:$0xff]
    %v242 = vld [vmem:[#allocation2 + $0x10] sm:$0xff]
    %v243 = vld [vmem:[#allocation2 + $0x18] sm:$0xff]
    %v244 = vld [vmem:[#allocation2 + $0x20] sm:$0xff]
    %v245 = vld [vmem:[#allocation2 + $0x28] sm:$0xff]
    %v246 = vld [vmem:[#allocation2 + $0x30] sm:$0xff]
    %v247 = vld [vmem:[#allocation2 + $0x38] sm:$0xff]
    %v248 = vld [vmem:[#allocation2 + $0x40] sm:$0xff]
    %v249 = vld [vmem:[#allocation2 + $0x48] sm:$0xff]
    %v250 = vld [vmem:[#allocation2 + $0x50] sm:$0xff]
    %v251 = vld [vmem:[#allocation2 + $0x58] sm:$0xff]
    %v252 = vld [vmem:[#allocation2 + $0x60] sm:$0xff]
    %v253 = vld [vmem:[#allocation2 + $0x68] sm:$0xff]
    %v254 = vld [vmem:[#allocation2 + $0x70] sm:$0xff]
    %v255 = vld [vmem:[#allocation2 + $0x78] sm:$0xff]
    %v256 = vld [vmem:[#allocation2 + $0x80] sm:$0xff]
    %v257 = vld [vmem:[#allocation2 + $0x88] sm:$0xff]
    %v258 = vld [vmem:[#allocation2 + $0x90] sm:$0xff]
    %v259 = vld [vmem:[#allocation2 + $0x98] sm:$0xff]
    %v260 = vld [vmem:[#allocation2 + $0xa0] sm:$0xff]
    %v261 = vld [vmem:[#allocation2 + $0xa8] sm:$0xff]
    %v262 = vld [vmem:[#allocation2 + $0xb0] sm:$0xff]
    %v263 = vld [vmem:[#allocation2 + $0xb8] sm:$0xff]
    %v264 = vld [vmem:[#allocation2 + $0xc0] sm:$0xff]
    %v265 = vld [vmem:[#allocation2 + $0xc8] sm:$0xff]
    %v266 = vld [vmem:[#allocation2 + $0xd0] sm:$0xff]
    %v267 = vld [vmem:[#allocation2 + $0xd8] sm:$0xff]
    %v268 = vld [vmem:[#allocation2 + $0xe0] sm:$0xff]
    %v269 = vld [vmem:[#allocation2 + $0xe8] sm:$0xff]
    %v270 = vld [vmem:[#allocation2 + $0xf0] sm:$0xff]
    %v271 = vld [vmem:[#allocation2 + $0xf8] sm:$0xff]
    %v272 = vld [vmem:[#allocation2 + $0x100] sm:$0xff]
    %v273 = vld [vmem:[#allocation2 + $0x108] sm:$0xff]
    %v274 = vld [vmem:[#allocation2 + $0x110] sm:$0xff]
    %v275 = vld [vmem:[#allocation2 + $0x118] sm:$0xff]
    %v276 = vld [vmem:[#allocation2 + $0x120] sm:$0xff]
    %v277 = vld [vmem:[#allocation2 + $0x128] sm:$0xff]
    %v278 = vld [vmem:[#allocation2 + $0x130] sm:$0xff]
    %v279 = vld [vmem:[#allocation2 + $0x138] sm:$0xff]
    %v280 = vld [vmem:[#allocation2 + $0x140] sm:$0xff]
    %v281 = vld [vmem:[#allocation2 + $0x148] sm:$0xff]
    %v282 = vld [vmem:[#allocation2 + $0x150] sm:$0xff]
    %v283 = vld [vmem:[#allocation2 + $0x158] sm:$0xff]
    %v284 = vld [vmem:[#allocation2 + $0x160] sm:$0xff]
    %v285 = vld [vmem:[#allocation2 + $0x168] sm:$0xff]
    %v286 = vld [vmem:[#allocation2 + $0x170] sm:$0xff]
    %v287 = vld [vmem:[#allocation2 + $0x178] sm:$0xff]
    %v288 = vld [vmem:[#allocation2 + $0x180] sm:$0xff]
    %v289 = vld [vmem:[#allocation2 + $0x188] sm:$0xff]
    %v290 = vld [vmem:[#allocation2 + $0x190] sm:$0xff]
    %v291 = vld [vmem:[#allocation2 + $0x198] sm:$0xff]
    %v292 = vld [vmem:[#allocation2 + $0x1a0] sm:$0xff]
    %v293 = vld [vmem:[#allocation2 + $0x1a8] sm:$0xff]
    %v294 = vld [vmem:[#allocation2 + $0x1b0] sm:$0xff]
    %v295 = vld [vmem:[#allocation2 + $0x1b8] sm:$0xff]
    %v296 = vld [vmem:[#allocation2 + $0x1c0] sm:$0xff]
    %v297 = vld [vmem:[#allocation2 + $0x1c8] sm:$0xff]
    %v298 = vld [vmem:[#allocation2 + $0x1d0] sm:$0xff]
    %v299 = vld [vmem:[#allocation2 + $0x1d8] sm:$0xff]
    %v300 = vld [vmem:[#allocation2 + $0x1e0] sm:$0xff]
    %v301 = vld [vmem:[#allocation2 + $0x1e8] sm:$0xff]
    %v302 = vld [vmem:[#allocation2 + $0x1f0] sm:$0xff]
    %v303 = vld [vmem:[#allocation2 + $0x1f8] sm:$0xff]
    %v304 = vld [vmem:[%s4] sm:$0x3]
    %v306 = vlaneseq
    %v307 = vshrl.u32 %v306, 7
    %v308 = vsub.s32 0, %v307
    %v309 = vrot.slane %v304, %v308
    %v310 = vlaneseq
    %v311 = vshrl.u32 %v310, 7
    %v312 = vsub.s32 1, %v311
    %v313 = vrot.slane %v304, %v312
    %v380 = vunpack.c.l.b16 %v240
    %v381 = vunpack.c.h.b16 %v240
    %v382 = vunpack.c.l.b16 %v241
    %v383 = vunpack.c.h.b16 %v241
    %v384 = vunpack.c.l.b16 %v242
    %v385 = vunpack.c.h.b16 %v242
    %v386 = vunpack.c.l.b16 %v243
    %v387 = vunpack.c.h.b16 %v243
    %v388 = vunpack.c.l.b16 %v244
    %v389 = vunpack.c.h.b16 %v244
    %v390 = vunpack.c.l.b16 %v245
    %v391 = vunpack.c.h.b16 %v245
    %v392 = vunpack.c.l.b16 %v246
    %v393 = vunpack.c.h.b16 %v246
    %v394 = vunpack.c.l.b16 %v247
    %v395 = vunpack.c.h.b16 %v247
    %v396 = vunpack.c.l.b16 %v248
    %v397 = vunpack.c.h.b16 %v248
    %v398 = vunpack.c.l.b16 %v249
    %v399 = vunpack.c.h.b16 %v249
    %v400 = vunpack.c.l.b16 %v250
    %v401 = vunpack.c.h.b16 %v250
    %v402 = vunpack.c.l.b16 %v251
    %v403 = vunpack.c.h.b16 %v251
    %v404 = vunpack.c.l.b16 %v252
    %v405 = vunpack.c.h.b16 %v252
    %v406 = vunpack.c.l.b16 %v253
    %v407 = vunpack.c.h.b16 %v253
    %v408 = vunpack.c.l.b16 %v254
    %v409 = vunpack.c.h.b16 %v254
    %v410 = vunpack.c.l.b16 %v255
    %v411 = vunpack.c.h.b16 %v255
    %v412 = vunpack.c.l.b16 %v256
    %v413 = vunpack.c.h.b16 %v256
    %v414 = vunpack.c.l.b16 %v257
    %v415 = vunpack.c.h.b16 %v257
    %v416 = vunpack.c.l.b16 %v258
    %v417 = vunpack.c.h.b16 %v258
    %v418 = vunpack.c.l.b16 %v259
    %v419 = vunpack.c.h.b16 %v259
    %v420 = vunpack.c.l.b16 %v260
    %v421 = vunpack.c.h.b16 %v260
    %v422 = vunpack.c.l.b16 %v261
    %v423 = vunpack.c.h.b16 %v261
    %v424 = vunpack.c.l.b16 %v262
    %v425 = vunpack.c.h.b16 %v262
    %v426 = vunpack.c.l.b16 %v263
    %v427 = vunpack.c.h.b16 %v263
    %v428 = vunpack.c.l.b16 %v264
    %v429 = vunpack.c.h.b16 %v264
    %v430 = vunpack.c.l.b16 %v265
    %v431 = vunpack.c.h.b16 %v265
    %v432 = vunpack.c.l.b16 %v266
    %v433 = vunpack.c.h.b16 %v266
    %v434 = vunpack.c.l.b16 %v267
    %v435 = vunpack.c.h.b16 %v267
    %v436 = vunpack.c.l.b16 %v268
    %v437 = vunpack.c.h.b16 %v268
    %v438 = vunpack.c.l.b16 %v269
    %v439 = vunpack.c.h.b16 %v269
    %v440 = vunpack.c.l.b16 %v270
    %v441 = vunpack.c.h.b16 %v270
    %v442 = vunpack.c.l.b16 %v271
    %v443 = vunpack.c.h.b16 %v271
    %v444 = vunpack.c.l.b16 %v272
    %v445 = vunpack.c.h.b16 %v272
    %v446 = vunpack.c.l.b16 %v273
    %v447 = vunpack.c.h.b16 %v273
    %v448 = vunpack.c.l.b16 %v274
    %v449 = vunpack.c.h.b16 %v274
    %v450 = vunpack.c.l.b16 %v275
    %v451 = vunpack.c.h.b16 %v275
    %v452 = vunpack.c.l.b16 %v276
    %v453 = vunpack.c.h.b16 %v276
    %v454 = vunpack.c.l.b16 %v277
    %v455 = vunpack.c.h.b16 %v277
    %v456 = vunpack.c.l.b16 %v278
    %v457 = vunpack.c.h.b16 %v278
    %v458 = vunpack.c.l.b16 %v279
    %v459 = vunpack.c.h.b16 %v279
    %v460 = vunpack.c.l.b16 %v280
    %v461 = vunpack.c.h.b16 %v280
    %v462 = vunpack.c.l.b16 %v281
    %v463 = vunpack.c.h.b16 %v281
    %v464 = vunpack.c.l.b16 %v282
    %v465 = vunpack.c.h.b16 %v282
    %v466 = vunpack.c.l.b16 %v283
    %v467 = vunpack.c.h.b16 %v283
    %v468 = vunpack.c.l.b16 %v284
    %v469 = vunpack.c.h.b16 %v284
    %v470 = vunpack.c.l.b16 %v285
    %v471 = vunpack.c.h.b16 %v285
    %v472 = vunpack.c.l.b16 %v286
    %v473 = vunpack.c.h.b16 %v286
    %v474 = vunpack.c.l.b16 %v287
    %v475 = vunpack.c.h.b16 %v287
    %v476 = vunpack.c.l.b16 %v288
    %v477 = vunpack.c.h.b16 %v288
    %v478 = vunpack.c.l.b16 %v289
    %v479 = vunpack.c.h.b16 %v289
    %v480 = vunpack.c.l.b16 %v290
    %v481 = vunpack.c.h.b16 %v290
    %v482 = vunpack.c.l.b16 %v291
    %v483 = vunpack.c.h.b16 %v291
    %v484 = vunpack.c.l.b16 %v292
    %v485 = vunpack.c.h.b16 %v292
    %v486 = vunpack.c.l.b16 %v293
    %v487 = vunpack.c.h.b16 %v293
    %v488 = vunpack.c.l.b16 %v294
    %v489 = vunpack.c.h.b16 %v294
    %v490 = vunpack.c.l.b16 %v295
    %v491 = vunpack.c.h.b16 %v295
    %v492 = vunpack.c.l.b16 %v296
    %v493 = vunpack.c.h.b16 %v296
    %v494 = vunpack.c.l.b16 %v297
    %v495 = vunpack.c.h.b16 %v297
    %v496 = vunpack.c.l.b16 %v298
    %v497 = vunpack.c.h.b16 %v298
    %v498 = vunpack.c.l.b16 %v299
    %v499 = vunpack.c.h.b16 %v299
    %v500 = vunpack.c.l.b16 %v300
    %v501 = vunpack.c.h.b16 %v300
    %v502 = vunpack.c.l.b16 %v301
    %v503 = vunpack.c.h.b16 %v301
    %v504 = vunpack.c.l.b16 %v302
    %v505 = vunpack.c.h.b16 %v302
    %v506 = vunpack.c.l.b16 %v303
    %v507 = vunpack.c.h.b16 %v303
    %v508 = vpack.c.b16 %v382, %v380
    %v509 = vpack.c.b16 %v383, %v381
    %v510 = vpack.c.b16 %v386, %v384
    %v511 = vpack.c.b16 %v387, %v385
    %v512 = vpack.c.b16 %v390, %v388
    %v513 = vpack.c.b16 %v391, %v389
    %v514 = vpack.c.b16 %v394, %v392
    %v515 = vpack.c.b16 %v395, %v393
    %v516 = vpack.c.b16 %v398, %v396
    %v517 = vpack.c.b16 %v399, %v397
    %v518 = vpack.c.b16 %v402, %v400
    %v519 = vpack.c.b16 %v403, %v401
    %v520 = vpack.c.b16 %v406, %v404
    %v521 = vpack.c.b16 %v407, %v405
    %v522 = vpack.c.b16 %v410, %v408
    %v523 = vpack.c.b16 %v411, %v409
    %v524 = vpack.c.b16 %v414, %v412
    %v525 = vpack.c.b16 %v415, %v413
    %v526 = vpack.c.b16 %v418, %v416
    %v527 = vpack.c.b16 %v419, %v417
    %v528 = vpack.c.b16 %v422, %v420
    %v529 = vpack.c.b16 %v423, %v421
    %v530 = vpack.c.b16 %v426, %v424
    %v531 = vpack.c.b16 %v427, %v425
    %v532 = vpack.c.b16 %v430, %v428
    %v533 = vpack.c.b16 %v431, %v429
    %v534 = vpack.c.b16 %v434, %v432
    %v535 = vpack.c.b16 %v435, %v433
    %v536 = vpack.c.b16 %v438, %v436
    %v537 = vpack.c.b16 %v439, %v437
    %v538 = vpack.c.b16 %v442, %v440
    %v539 = vpack.c.b16 %v443, %v441
    %v540 = vpack.c.b16 %v446, %v444
    %v541 = vpack.c.b16 %v447, %v445
    %v542 = vpack.c.b16 %v450, %v448
    %v543 = vpack.c.b16 %v451, %v449
    %v544 = vpack.c.b16 %v454, %v452
    %v545 = vpack.c.b16 %v455, %v453
    %v546 = vpack.c.b16 %v458, %v456
    %v547 = vpack.c.b16 %v459, %v457
    %v548 = vpack.c.b16 %v462, %v460
    %v549 = vpack.c.b16 %v463, %v461
    %v550 = vpack.c.b16 %v466, %v464
    %v551 = vpack.c.b16 %v467, %v465
    %v552 = vpack.c.b16 %v470, %v468
    %v553 = vpack.c.b16 %v471, %v469
    %v554 = vpack.c.b16 %v474, %v472
    %v555 = vpack.c.b16 %v475, %v473
    %v556 = vpack.c.b16 %v478, %v476
    %v557 = vpack.c.b16 %v479, %v477
    %v558 = vpack.c.b16 %v482, %v480
    %v559 = vpack.c.b16 %v483, %v481
    %v560 = vpack.c.b16 %v486, %v484
    %v561 = vpack.c.b16 %v487, %v485
    %v562 = vpack.c.b16 %v490, %v488
    %v563 = vpack.c.b16 %v491, %v489
    %v564 = vpack.c.b16 %v494, %v492
    %v565 = vpack.c.b16 %v495, %v493
    %v566 = vpack.c.b16 %v498, %v496
    %v567 = vpack.c.b16 %v499, %v497
    %v568 = vpack.c.b16 %v502, %v500
    %v569 = vpack.c.b16 %v503, %v501
    %v570 = vpack.c.b16 %v506, %v504
    %v571 = vpack.c.b16 %v507, %v505
    %636 = vmatprep.subr.bf16.mxu0 %v509
    %637 = vmatpush1.bf16.msra.mxu0 %v508
    %638 = vmatprep.subr.bf16.mxu0 %v511
    %639 = vmatpush1.bf16.msra.mxu0 %v510
    %640 = vmatprep.subr.bf16.mxu0 %v513
    %641 = vmatpush1.bf16.msra.mxu0 %v512
    %642 = vmatprep.subr.bf16.mxu0 %v515
    %643 = vmatpush1.bf16.msra.mxu0 %v514
    %644 = vmatprep.subr.bf16.mxu0 %v517
    %645 = vmatpush1.bf16.msra.mxu0 %v516
    %646 = vmatprep.subr.bf16.mxu0 %v519
    %647 = vmatpush1.bf16.msra.mxu0 %v518
    %648 = vmatprep.subr.bf16.mxu0 %v521
    %649 = vmatpush1.bf16.msra.mxu0 %v520
    %650 = vmatprep.subr.bf16.mxu0 %v523
    %651 = vmatpush1.bf16.msra.mxu0 %v522
    %652 = vmatprep.subr.bf16.mxu0 %v525
    %653 = vmatpush1.bf16.msra.mxu0 %v524
    %654 = vmatprep.subr.bf16.mxu0 %v527
    %655 = vmatpush1.bf16.msra.mxu0 %v526
    %656 = vmatprep.subr.bf16.mxu0 %v529
    %657 = vmatpush1.bf16.msra.mxu0 %v528
    %658 = vmatprep.subr.bf16.mxu0 %v531
    %659 = vmatpush1.bf16.msra.mxu0 %v530
    %660 = vmatprep.subr.bf16.mxu0 %v533
    %661 = vmatpush1.bf16.msra.mxu0 %v532
    %662 = vmatprep.subr.bf16.mxu0 %v535
    %663 = vmatpush1.bf16.msra.mxu0 %v534
    %664 = vmatprep.subr.bf16.mxu0 %v537
    %665 = vmatpush1.bf16.msra.mxu0 %v536
    %666 = vmatprep.subr.bf16.mxu0 %v539
    %667 = vmatpush1.bf16.msra.mxu0 %v538
    %668 = vmatprep.mubr.bf16.mxu0 %v237
    %669 = vmatmul.mubr.bf16.gmra.mrb[0].mxu0 %v236
    %v670 = vpop.f32.mrb[0].mxu0
    %v671 = vadd.f32 %v309, %v670
    %v672 = vpop.f32.mrb[0].mxu0
    %v673 = vadd.f32 %v313, %v672
    %v674 = vpop.f32.mrb[0].mxu0
    %v675 = vadd.f32 %v309, %v674
    %v676 = vpop.f32.mrb[0].mxu0
    %v677 = vadd.f32 %v313, %v676
    %678 = vdwg.mxu0
    %679 = vmatprep.subr.bf16.mxu0 %v541
    %680 = vmatpush1.bf16.msra.mxu0 %v540
    %681 = vmatprep.subr.bf16.mxu0 %v543
    %682 = vmatpush1.bf16.msra.mxu0 %v542
    %683 = vmatprep.subr.bf16.mxu0 %v545
    %684 = vmatpush1.bf16.msra.mxu0 %v544
    %685 = vmatprep.subr.bf16.mxu0 %v547
    %686 = vmatpush1.bf16.msra.mxu0 %v546
    %687 = vmatprep.subr.bf16.mxu0 %v549
    %688 = vmatpush1.bf16.msra.mxu0 %v548
    %689 = vmatprep.subr.bf16.mxu0 %v551
    %690 = vmatpush1.bf16.msra.mxu0 %v550
    %691 = vmatprep.subr.bf16.mxu0 %v553
    %692 = vmatpush1.bf16.msra.mxu0 %v552
    %693 = vmatprep.subr.bf16.mxu0 %v555
    %694 = vmatpush1.bf16.msra.mxu0 %v554
    %695 = vmatprep.subr.bf16.mxu0 %v557
    %696 = vmatpush1.bf16.msra.mxu0 %v556
    %697 = vmatprep.subr.bf16.mxu0 %v559
    %698 = vmatpush1.bf16.msra.mxu0 %v558
    %699 = vmatprep.subr.bf16.mxu0 %v561
    %700 = vmatpush1.bf16.msra.mxu0 %v560
    %701 = vmatprep.subr.bf16.mxu0 %v563
    %702 = vmatpush1.bf16.msra.mxu0 %v562
    %703 = vmatprep.subr.bf16.mxu0 %v565
    %704 = vmatpush1.bf16.msra.mxu0 %v564
    %705 = vmatprep.subr.bf16.mxu0 %v567
    %706 = vmatpush1.bf16.msra.mxu0 %v566
    %707 = vmatprep.subr.bf16.mxu0 %v569
    %708 = vmatpush1.bf16.msra.mxu0 %v568
    %709 = vmatprep.subr.bf16.mxu0 %v571
    %710 = vmatpush1.bf16.msra.mxu0 %v570
    %711 = vmatprep.mubr.bf16.mxu0 %v239
    %712 = vmatmul.mubr.bf16.gmra.mrb[0].mxu0 %v238
    %v713 = vpop.f32.mrb[0].mxu0
    %v714 = vadd.f32 %v671, %v713
    %v715 = vpop.f32.mrb[0].mxu0
    %v716 = vadd.f32 %v673, %v715
    %v717 = vpop.f32.mrb[0].mxu0
    %v718 = vadd.f32 %v675, %v717
    %v719 = vpop.f32.mrb[0].mxu0
    %v720 = vadd.f32 %v677, %v719
    %721 = vdwg.mxu0
    %v722 = vmax.f32 %v714, 0.0
    %v723 = vmax.f32 %v716, 0.0
    %v724 = vmax.f32 %v718, 0.0
    %v725 = vmax.f32 %v720, 0.0
    %v726 = vpack.c.bf16 %v724, %v722
    %v727 = vpack.c.bf16 %v725, %v723
    %v728 = vld [vmem:[#allocation4] sm:$0xff]
    %v729 = vld [vmem:[#allocation4 + $0x8] sm:$0xff]
    %v730 = vld [vmem:[#allocation4 + $0x10] sm:$0xff]
    %v731 = vld [vmem:[#allocation4 + $0x18] sm:$0xff]
    %v732 = vld [vmem:[#allocation4 + $0x20] sm:$0xff]
    %v733 = vld [vmem:[#allocation4 + $0x28] sm:$0xff]
    %v734 = vld [vmem:[#allocation4 + $0x30] sm:$0xff]
    %v735 = vld [vmem:[#allocation4 + $0x38] sm:$0xff]
    %v736 = vld [vmem:[#allocation4 + $0x40] sm:$0xff]
    %v737 = vld [vmem:[#allocation4 + $0x48] sm:$0xff]
    %v738 = vld [vmem:[#allocation4 + $0x50] sm:$0xff]
    %v739 = vld [vmem:[#allocation4 + $0x58] sm:$0xff]
    %v740 = vld [vmem:[#allocation4 + $0x60] sm:$0xff]
    %v741 = vld [vmem:[#allocation4 + $0x68] sm:$0xff]
    %v742 = vld [vmem:[#allocation4 + $0x70] sm:$0xff]
    %v743 = vld [vmem:[#allocation4 + $0x78] sm:$0xff]
    %v744 = vld [vmem:[#allocation4 + $0x80] sm:$0xff]
    %v745 = vld [vmem:[#allocation4 + $0x88] sm:$0xff]
    %v746 = vld [vmem:[#allocation4 + $0x90] sm:$0xff]
    %v747 = vld [vmem:[#allocation4 + $0x98] sm:$0xff]
    %v748 = vld [vmem:[#allocation4 + $0xa0] sm:$0xff]
    %v749 = vld [vmem:[#allocation4 + $0xa8] sm:$0xff]
    %v750 = vld [vmem:[#allocation4 + $0xb0] sm:$0xff]
    %v751 = vld [vmem:[#allocation4 + $0xb8] sm:$0xff]
    %v752 = vld [vmem:[#allocation4 + $0xc0] sm:$0xff]
    %v753 = vld [vmem:[#allocation4 + $0xc8] sm:$0xff]
    %v754 = vld [vmem:[#allocation4 + $0xd0] sm:$0xff]
    %v755 = vld [vmem:[#allocation4 + $0xd8] sm:$0xff]
    %v756 = vld [vmem:[#allocation4 + $0xe0] sm:$0xff]
    %v757 = vld [vmem:[#allocation4 + $0xe8] sm:$0xff]
    %v758 = vld [vmem:[#allocation4 + $0xf0] sm:$0xff]
    %v759 = vld [vmem:[#allocation4 + $0xf8] sm:$0xff]
    %v760 = vld [vmem:[#allocation4 + $0x100] sm:$0xff]
    %v761 = vld [vmem:[#allocation4 + $0x108] sm:$0xff]
    %v762 = vld [vmem:[#allocation4 + $0x110] sm:$0xff]
    %v763 = vld [vmem:[#allocation4 + $0x118] sm:$0xff]
    %v764 = vld [vmem:[#allocation4 + $0x120] sm:$0xff]
    %v765 = vld [vmem:[#allocation4 + $0x128] sm:$0xff]
    %v766 = vld [vmem:[#allocation4 + $0x130] sm:$0xff]
    %v767 = vld [vmem:[#allocation4 + $0x138] sm:$0xff]
    %v768 = vld [vmem:[#allocation4 + $0x140] sm:$0xff]
    %v769 = vld [vmem:[#allocation4 + $0x148] sm:$0xff]
    %v770 = vld [vmem:[#allocation4 + $0x150] sm:$0xff]
    %v771 = vld [vmem:[#allocation4 + $0x158] sm:$0xff]
    %v772 = vld [vmem:[#allocation4 + $0x160] sm:$0xff]
    %v773 = vld [vmem:[#allocation4 + $0x168] sm:$0xff]
    %v774 = vld [vmem:[#allocation4 + $0x170] sm:$0xff]
    %v775 = vld [vmem:[#allocation4 + $0x178] sm:$0xff]
    %v776 = vld [vmem:[#allocation4 + $0x180] sm:$0xff]
    %v777 = vld [vmem:[#allocation4 + $0x188] sm:$0xff]
    %v778 = vld [vmem:[#allocation4 + $0x190] sm:$0xff]
    %v779 = vld [vmem:[#allocation4 + $0x198] sm:$0xff]
    %v780 = vld [vmem:[#allocation4 + $0x1a0] sm:$0xff]
    %v781 = vld [vmem:[#allocation4 + $0x1a8] sm:$0xff]
    %v782 = vld [vmem:[#allocation4 + $0x1b0] sm:$0xff]
    %v783 = vld [vmem:[#allocation4 + $0x1b8] sm:$0xff]
    %v784 = vld [vmem:[#allocation4 + $0x1c0] sm:$0xff]
    %v785 = vld [vmem:[#allocation4 + $0x1c8] sm:$0xff]
    %v786 = vld [vmem:[#allocation4 + $0x1d0] sm:$0xff]
    %v787 = vld [vmem:[#allocation4 + $0x1d8] sm:$0xff]
    %v788 = vld [vmem:[#allocation4 + $0x1e0] sm:$0xff]
    %v789 = vld [vmem:[#allocation4 + $0x1e8] sm:$0xff]
    %v790 = vld [vmem:[#allocation4 + $0x1f0] sm:$0xff]
    %v791 = vld [vmem:[#allocation4 + $0x1f8] sm:$0xff]
    %v792 = vld [vmem:[%s6] sm:$0xf]
    %v794 = vlaneseq
    %v795 = vshrl.u32 %v794, 7
    %v796 = vsub.s32 0, %v795
    %v797 = vrot.slane %v792, %v796
    %v798 = vlaneseq
    %v799 = vshrl.u32 %v798, 7
    %v800 = vsub.s32 1, %v799
    %v801 = vrot.slane %v792, %v800
    %v802 = vlaneseq
    %v803 = vshrl.u32 %v802, 7
    %v804 = vsub.s32 2, %v803
    %v805 = vrot.slane %v792, %v804
    %v806 = vlaneseq
    %v807 = vshrl.u32 %v806, 7
    %v808 = vsub.s32 3, %v807
    %v809 = vrot.slane %v792, %v808
    %v878 = vunpack.c.l.b16 %v728
    %v879 = vunpack.c.h.b16 %v728
    %v880 = vunpack.c.l.b16 %v729
    %v881 = vunpack.c.h.b16 %v729
    %v882 = vunpack.c.l.b16 %v730
    %v883 = vunpack.c.h.b16 %v730
    %v884 = vunpack.c.l.b16 %v731
    %v885 = vunpack.c.h.b16 %v731
    %v886 = vunpack.c.l.b16 %v732
    %v887 = vunpack.c.h.b16 %v732
    %v888 = vunpack.c.l.b16 %v733
    %v889 = vunpack.c.h.b16 %v733
    %v890 = vunpack.c.l.b16 %v734
    %v891 = vunpack.c.h.b16 %v734
    %v892 = vunpack.c.l.b16 %v735
    %v893 = vunpack.c.h.b16 %v735
    %v894 = vunpack.c.l.b16 %v736
    %v895 = vunpack.c.h.b16 %v736
    %v896 = vunpack.c.l.b16 %v737
    %v897 = vunpack.c.h.b16 %v737
    %v898 = vunpack.c.l.b16 %v738
    %v899 = vunpack.c.h.b16 %v738
    %v900 = vunpack.c.l.b16 %v739
    %v901 = vunpack.c.h.b16 %v739
    %v902 = vunpack.c.l.b16 %v740
    %v903 = vunpack.c.h.b16 %v740
    %v904 = vunpack.c.l.b16 %v741
    %v905 = vunpack.c.h.b16 %v741
    %v906 = vunpack.c.l.b16 %v742
    %v907 = vunpack.c.h.b16 %v742
    %v908 = vunpack.c.l.b16 %v743
    %v909 = vunpack.c.h.b16 %v743
    %v910 = vunpack.c.l.b16 %v744
    %v911 = vunpack.c.h.b16 %v744
    %v912 = vunpack.c.l.b16 %v745
    %v913 = vunpack.c.h.b16 %v745
    %v914 = vunpack.c.l.b16 %v746
    %v915 = vunpack.c.h.b16 %v746
    %v916 = vunpack.c.l.b16 %v747
    %v917 = vunpack.c.h.b16 %v747
    %v918 = vunpack.c.l.b16 %v748
    %v919 = vunpack.c.h.b16 %v748
    %v920 = vunpack.c.l.b16 %v749
    %v921 = vunpack.c.h.b16 %v749
    %v922 = vunpack.c.l.b16 %v750
    %v923 = vunpack.c.h.b16 %v750
    %v924 = vunpack.c.l.b16 %v751
    %v925 = vunpack.c.h.b16 %v751
    %v926 = vunpack.c.l.b16 %v752
    %v927 = vunpack.c.h.b16 %v752
    %v928 = vunpack.c.l.b16 %v753
    %v929 = vunpack.c.h.b16 %v753
    %v930 = vunpack.c.l.b16 %v754
    %v931 = vunpack.c.h.b16 %v754
    %v932 = vunpack.c.l.b16 %v755
    %v933 = vunpack.c.h.b16 %v755
    %v934 = vunpack.c.l.b16 %v756
    %v935 = vunpack.c.h.b16 %v756
    %v936 = vunpack.c.l.b16 %v757
    %v937 = vunpack.c.h.b16 %v757
    %v938 = vunpack.c.l.b16 %v758
    %v939 = vunpack.c.h.b16 %v758
    %v940 = vunpack.c.l.b16 %v759
    %v941 = vunpack.c.h.b16 %v759
    %v942 = vunpack.c.l.b16 %v760
    %v943 = vunpack.c.h.b16 %v760
    %v944 = vunpack.c.l.b16 %v761
    %v945 = vunpack.c.h.b16 %v761
    %v946 = vunpack.c.l.b16 %v762
    %v947 = vunpack.c.h.b16 %v762
    %v948 = vunpack.c.l.b16 %v763
    %v949 = vunpack.c.h.b16 %v763
    %v950 = vunpack.c.l.b16 %v764
    %v951 = vunpack.c.h.b16 %v764
    %v952 = vunpack.c.l.b16 %v765
    %v953 = vunpack.c.h.b16 %v765
    %v954 = vunpack.c.l.b16 %v766
    %v955 = vunpack.c.h.b16 %v766
    %v956 = vunpack.c.l.b16 %v767
    %v957 = vunpack.c.h.b16 %v767
    %v958 = vunpack.c.l.b16 %v768
    %v959 = vunpack.c.h.b16 %v768
    %v960 = vunpack.c.l.b16 %v769
    %v961 = vunpack.c.h.b16 %v769
    %v962 = vunpack.c.l.b16 %v770
    %v963 = vunpack.c.h.b16 %v770
    %v964 = vunpack.c.l.b16 %v771
    %v965 = vunpack.c.h.b16 %v771
    %v966 = vunpack.c.l.b16 %v772
    %v967 = vunpack.c.h.b16 %v772
    %v968 = vunpack.c.l.b16 %v773
    %v969 = vunpack.c.h.b16 %v773
    %v970 = vunpack.c.l.b16 %v774
    %v971 = vunpack.c.h.b16 %v774
    %v972 = vunpack.c.l.b16 %v775
    %v973 = vunpack.c.h.b16 %v775
    %v974 = vunpack.c.l.b16 %v776
    %v975 = vunpack.c.h.b16 %v776
    %v976 = vunpack.c.l.b16 %v777
    %v977 = vunpack.c.h.b16 %v777
    %v978 = vunpack.c.l.b16 %v778
    %v979 = vunpack.c.h.b16 %v778
    %v980 = vunpack.c.l.b16 %v779
    %v981 = vunpack.c.h.b16 %v779
    %v982 = vunpack.c.l.b16 %v780
    %v983 = vunpack.c.h.b16 %v780
    %v984 = vunpack.c.l.b16 %v781
    %v985 = vunpack.c.h.b16 %v781
    %v986 = vunpack.c.l.b16 %v782
    %v987 = vunpack.c.h.b16 %v782
    %v988 = vunpack.c.l.b16 %v783
    %v989 = vunpack.c.h.b16 %v783
    %v990 = vunpack.c.l.b16 %v784
    %v991 = vunpack.c.h.b16 %v784
    %v992 = vunpack.c.l.b16 %v785
    %v993 = vunpack.c.h.b16 %v785
    %v994 = vunpack.c.l.b16 %v786
    %v995 = vunpack.c.h.b16 %v786
    %v996 = vunpack.c.l.b16 %v787
    %v997 = vunpack.c.h.b16 %v787
    %v998 = vunpack.c.l.b16 %v788
    %v999 = vunpack.c.h.b16 %v788
    %v1000 = vunpack.c.l.b16 %v789
    %v1001 = vunpack.c.h.b16 %v789
    %v1002 = vunpack.c.l.b16 %v790
    %v1003 = vunpack.c.h.b16 %v790
    %v1004 = vunpack.c.l.b16 %v791
    %v1005 = vunpack.c.h.b16 %v791
    %v1006 = vpack.c.b16 %v882, %v878
    %v1007 = vpack.c.b16 %v883, %v879
    %v1008 = vpack.c.b16 %v884, %v880
    %v1009 = vpack.c.b16 %v885, %v881
    %v1010 = vpack.c.b16 %v890, %v886
    %v1011 = vpack.c.b16 %v891, %v887
    %v1012 = vpack.c.b16 %v892, %v888
    %v1013 = vpack.c.b16 %v893, %v889
    %v1014 = vpack.c.b16 %v898, %v894
    %v1015 = vpack.c.b16 %v899, %v895
    %v1016 = vpack.c.b16 %v900, %v896
    %v1017 = vpack.c.b16 %v901, %v897
    %v1018 = vpack.c.b16 %v906, %v902
    %v1019 = vpack.c.b16 %v907, %v903
    %v1020 = vpack.c.b16 %v908, %v904
    %v1021 = vpack.c.b16 %v909, %v905
    %v1022 = vpack.c.b16 %v914, %v910
    %v1023 = vpack.c.b16 %v915, %v911
    %v1024 = vpack.c.b16 %v916, %v912
    %v1025 = vpack.c.b16 %v917, %v913
    %v1026 = vpack.c.b16 %v922, %v918
    %v1027 = vpack.c.b16 %v923, %v919
    %v1028 = vpack.c.b16 %v924, %v920
    %v1029 = vpack.c.b16 %v925, %v921
    %v1030 = vpack.c.b16 %v930, %v926
    %v1031 = vpack.c.b16 %v931, %v927
    %v1032 = vpack.c.b16 %v932, %v928
    %v1033 = vpack.c.b16 %v933, %v929
    %v1034 = vpack.c.b16 %v938, %v934
    %v1035 = vpack.c.b16 %v939, %v935
    %v1036 = vpack.c.b16 %v940, %v936
    %v1037 = vpack.c.b16 %v941, %v937
    %v1038 = vpack.c.b16 %v946, %v942
    %v1039 = vpack.c.b16 %v947, %v943
    %v1040 = vpack.c.b16 %v948, %v944
    %v1041 = vpack.c.b16 %v949, %v945
    %v1042 = vpack.c.b16 %v954, %v950
    %v1043 = vpack.c.b16 %v955, %v951
    %v1044 = vpack.c.b16 %v956, %v952
    %v1045 = vpack.c.b16 %v957, %v953
    %v1046 = vpack.c.b16 %v962, %v958
    %v1047 = vpack.c.b16 %v963, %v959
    %v1048 = vpack.c.b16 %v964, %v960
    %v1049 = vpack.c.b16 %v965, %v961
    %v1050 = vpack.c.b16 %v970, %v966
    %v1051 = vpack.c.b16 %v971, %v967
    %v1052 = vpack.c.b16 %v972, %v968
    %v1053 = vpack.c.b16 %v973, %v969
    %v1054 = vpack.c.b16 %v978, %v974
    %v1055 = vpack.c.b16 %v979, %v975
    %v1056 = vpack.c.b16 %v980, %v976
    %v1057 = vpack.c.b16 %v981, %v977
    %v1058 = vpack.c.b16 %v986, %v982
    %v1059 = vpack.c.b16 %v987, %v983
    %v1060 = vpack.c.b16 %v988, %v984
    %v1061 = vpack.c.b16 %v989, %v985
    %v1062 = vpack.c.b16 %v994, %v990
    %v1063 = vpack.c.b16 %v995, %v991
    %v1064 = vpack.c.b16 %v996, %v992
    %v1065 = vpack.c.b16 %v997, %v993
    %v1066 = vpack.c.b16 %v1002, %v998
    %v1067 = vpack.c.b16 %v1003, %v999
    %v1068 = vpack.c.b16 %v1004, %v1000
    %v1069 = vpack.c.b16 %v1005, %v1001
    %1134 = vmatprep.subr.bf16.mxu0 %v1007
    %1135 = vmatpush1.bf16.msra.mxu0 %v1006
    %1136 = vmatprep.subr.bf16.mxu0 %v1011
    %1137 = vmatpush1.bf16.msra.mxu0 %v1010
    %1138 = vmatprep.subr.bf16.mxu0 %v1015
    %1139 = vmatpush1.bf16.msra.mxu0 %v1014
    %1140 = vmatprep.subr.bf16.mxu0 %v1019
    %1141 = vmatpush1.bf16.msra.mxu0 %v1018
    %1142 = vmatprep.subr.bf16.mxu0 %v1023
    %1143 = vmatpush1.bf16.msra.mxu0 %v1022
    %1144 = vmatprep.subr.bf16.mxu0 %v1027
    %1145 = vmatpush1.bf16.msra.mxu0 %v1026
    %1146 = vmatprep.subr.bf16.mxu0 %v1031
    %1147 = vmatpush1.bf16.msra.mxu0 %v1030
    %1148 = vmatprep.subr.bf16.mxu0 %v1035
    %1149 = vmatpush1.bf16.msra.mxu0 %v1034
    %1150 = vmatprep.subr.bf16.mxu0 %v1039
    %1151 = vmatpush1.bf16.msra.mxu0 %v1038
    %1152 = vmatprep.subr.bf16.mxu0 %v1043
    %1153 = vmatpush1.bf16.msra.mxu0 %v1042
    %1154 = vmatprep.subr.bf16.mxu0 %v1047
    %1155 = vmatpush1.bf16.msra.mxu0 %v1046
    %1156 = vmatprep.subr.bf16.mxu0 %v1051
    %1157 = vmatpush1.bf16.msra.mxu0 %v1050
    %1158 = vmatprep.subr.bf16.mxu0 %v1055
    %1159 = vmatpush1.bf16.msra.mxu0 %v1054
    %1160 = vmatprep.subr.bf16.mxu0 %v1059
    %1161 = vmatpush1.bf16.msra.mxu0 %v1058
    %1162 = vmatprep.subr.bf16.mxu0 %v1063
    %1163 = vmatpush1.bf16.msra.mxu0 %v1062
    %1164 = vmatprep.subr.bf16.mxu0 %v1067
    %1165 = vmatpush1.bf16.msra.mxu0 %v1066
    %1166 = vmatprep.mubr.bf16.mxu0 %v727
    %1167 = vmatmul.mubr.bf16.gmra.mrb[0].mxu0 %v726
    %v1168 = vpop.f32.mrb[0].mxu0
    %v1169 = vadd.f32 %v797, %v1168
    %v1170 = vpop.f32.mrb[0].mxu0
    %v1171 = vadd.f32 %v801, %v1170
    %v1172 = vpop.f32.mrb[0].mxu0
    %v1173 = vadd.f32 %v797, %v1172
    %v1174 = vpop.f32.mrb[0].mxu0
    %v1175 = vadd.f32 %v801, %v1174
    %1176 = vdwg.mxu0
    %1177 = vmatprep.subr.bf16.mxu0 %v1009
    %1178 = vmatpush1.bf16.msra.mxu0 %v1008
    %1179 = vmatprep.subr.bf16.mxu0 %v1013
    %1180 = vmatpush1.bf16.msra.mxu0 %v1012
    %1181 = vmatprep.subr.bf16.mxu0 %v1017
    %1182 = vmatpush1.bf16.msra.mxu0 %v1016
    %1183 = vmatprep.subr.bf16.mxu0 %v1021
    %1184 = vmatpush1.bf16.msra.mxu0 %v1020
    %1185 = vmatprep.subr.bf16.mxu0 %v1025
    %1186 = vmatpush1.bf16.msra.mxu0 %v1024
    %1187 = vmatprep.subr.bf16.mxu0 %v1029
    %1188 = vmatpush1.bf16.msra.mxu0 %v1028
    %1189 = vmatprep.subr.bf16.mxu0 %v1033
    %1190 = vmatpush1.bf16.msra.mxu0 %v1032
    %1191 = vmatprep.subr.bf16.mxu0 %v1037
    %1192 = vmatpush1.bf16.msra.mxu0 %v1036
    %1193 = vmatprep.subr.bf16.mxu0 %v1041
    %1194 = vmatpush1.bf16.msra.mxu0 %v1040
    %1195 = vmatprep.subr.bf16.mxu0 %v1045
    %1196 = vmatpush1.bf16.msra.mxu0 %v1044
    %1197 = vmatprep.subr.bf16.mxu0 %v1049
    %1198 = vmatpush1.bf16.msra.mxu0 %v1048
    %1199 = vmatprep.subr.bf16.mxu0 %v1053
    %1200 = vmatpush1.bf16.msra.mxu0 %v1052
    %1201 = vmatprep.subr.bf16.mxu0 %v1057
    %1202 = vmatpush1.bf16.msra.mxu0 %v1056
    %1203 = vmatprep.subr.bf16.mxu0 %v1061
    %1204 = vmatpush1.bf16.msra.mxu0 %v1060
    %1205 = vmatprep.subr.bf16.mxu0 %v1065
    %1206 = vmatpush1.bf16.msra.mxu0 %v1064
    %1207 = vmatprep.subr.bf16.mxu0 %v1069
    %1208 = vmatpush1.bf16.msra.mxu0 %v1068
    %1209 = vmatprep.mubr.bf16.mxu0 %v727
    %1210 = vmatmul.mubr.bf16.gmra.mrb[0].mxu0 %v726
    %v1211 = vpop.f32.mrb[0].mxu0
    %v1212 = vadd.f32 %v805, %v1211
    %v1213 = vpop.f32.mrb[0].mxu0
    %v1214 = vadd.f32 %v809, %v1213
    %v1215 = vpop.f32.mrb[0].mxu0
    %v1216 = vadd.f32 %v805, %v1215
    %v1217 = vpop.f32.mrb[0].mxu0
    %v1218 = vadd.f32 %v809, %v1217
    %1219 = vdwg.mxu0
    %v1220 = vmax.f32 %v1169, 0.0
    %v1221 = vmax.f32 %v1171, 0.0
    %v1222 = vmax.f32 %v1212, 0.0
    %v1223 = vmax.f32 %v1214, 0.0
    %v1224 = vmax.f32 %v1173, 0.0
    %v1225 = vmax.f32 %v1175, 0.0
    %v1226 = vmax.f32 %v1216, 0.0
    %v1227 = vmax.f32 %v1218, 0.0
    %v1228 = vpack.c.bf16 %v1224, %v1220
    %v1229 = vpack.c.bf16 %v1225, %v1221
    %v1230 = vpack.c.bf16 %v1226, %v1222
    %v1231 = vpack.c.bf16 %v1227, %v1223
    %v1232 = vld [vmem:[%s7] sm:$0xf]
    %v1233 = vld [vmem:[%s7 + $0x4] sm:$0xf]
    %v1234 = vld [vmem:[%s7 + $0x8] sm:$0xf]
    %v1235 = vld [vmem:[%s7 + $0xc] sm:$0xf]
    %v1236 = vld [vmem:[%s7 + $0x10] sm:$0xf]
    %v1237 = vld [vmem:[%s7 + $0x14] sm:$0xf]
    %v1238 = vld [vmem:[%s7 + $0x18] sm:$0xf]
    %v1239 = vld [vmem:[%s7 + $0x1c] sm:$0xf]
    %v1240 = vld [vmem:[%s7 + $0x20] sm:$0xf]
    %v1241 = vld [vmem:[%s7 + $0x24] sm:$0xf]
    %v1242 = vld [vmem:[%s7 + $0x28] sm:$0xf]
    %v1243 = vld [vmem:[%s7 + $0x2c] sm:$0xf]
    %v1244 = vld [vmem:[%s7 + $0x30] sm:$0xf]
    %v1245 = vld [vmem:[%s7 + $0x34] sm:$0xf]
    %v1246 = vld [vmem:[%s7 + $0x38] sm:$0xf]
    %v1247 = vld [vmem:[%s7 + $0x3c] sm:$0xf]
    %v1248 = vld [vmem:[%s7 + $0x40] sm:$0xf]
    %v1249 = vld [vmem:[%s7 + $0x44] sm:$0xf]
    %v1250 = vld [vmem:[%s7 + $0x48] sm:$0xf]
    %v1251 = vld [vmem:[%s7 + $0x4c] sm:$0xf]
    %v1252 = vld [vmem:[%s7 + $0x50] sm:$0xf]
    %v1253 = vld [vmem:[%s7 + $0x54] sm:$0xf]
    %v1254 = vld [vmem:[%s7 + $0x58] sm:$0xf]
    %v1255 = vld [vmem:[%s7 + $0x5c] sm:$0xf]
    %v1256 = vld [vmem:[%s7 + $0x60] sm:$0xf]
    %v1257 = vld [vmem:[%s7 + $0x64] sm:$0xf]
    %v1258 = vld [vmem:[%s7 + $0x68] sm:$0xf]
    %v1259 = vld [vmem:[%s7 + $0x6c] sm:$0xf]
    %v1260 = vld [vmem:[%s7 + $0x70] sm:$0xf]
    %v1261 = vld [vmem:[%s7 + $0x74] sm:$0xf]
    %v1262 = vld [vmem:[%s7 + $0x78] sm:$0xf]
    %v1263 = vld [vmem:[%s7 + $0x7c] sm:$0xf]
    %v1264 = vld [vmem:[%s7 + $0x80] sm:$0xf]
    %v1265 = vld [vmem:[%s7 + $0x84] sm:$0xf]
    %v1266 = vld [vmem:[%s7 + $0x88] sm:$0xf]
    %v1267 = vld [vmem:[%s7 + $0x8c] sm:$0xf]
    %v1268 = vld [vmem:[%s7 + $0x90] sm:$0xf]
    %v1269 = vld [vmem:[%s7 + $0x94] sm:$0xf]
    %v1270 = vld [vmem:[%s7 + $0x98] sm:$0xf]
    %v1271 = vld [vmem:[%s7 + $0x9c] sm:$0xf]
    %v1272 = vld [vmem:[%s7 + $0xa0] sm:$0xf]
    %v1273 = vld [vmem:[%s7 + $0xa4] sm:$0xf]
    %v1274 = vld [vmem:[%s7 + $0xa8] sm:$0xf]
    %v1275 = vld [vmem:[%s7 + $0xac] sm:$0xf]
    %v1276 = vld [vmem:[%s7 + $0xb0] sm:$0xf]
    %v1277 = vld [vmem:[%s7 + $0xb4] sm:$0xf]
    %v1278 = vld [vmem:[%s7 + $0xb8] sm:$0xf]
    %v1279 = vld [vmem:[%s7 + $0xbc] sm:$0xf]
    %v1280 = vld [vmem:[%s7 + $0xc0] sm:$0xf]
    %v1281 = vld [vmem:[%s7 + $0xc4] sm:$0xf]
    %v1282 = vld [vmem:[%s7 + $0xc8] sm:$0xf]
    %v1283 = vld [vmem:[%s7 + $0xcc] sm:$0xf]
    %v1284 = vld [vmem:[%s7 + $0xd0] sm:$0xf]
    %v1285 = vld [vmem:[%s7 + $0xd4] sm:$0xf]
    %v1286 = vld [vmem:[%s7 + $0xd8] sm:$0xf]
    %v1287 = vld [vmem:[%s7 + $0xdc] sm:$0xf]
    %v1288 = vld [vmem:[%s7 + $0xe0] sm:$0xf]
    %v1289 = vld [vmem:[%s7 + $0xe4] sm:$0xf]
    %v1290 = vld [vmem:[%s7 + $0xe8] sm:$0xf]
    %v1291 = vld [vmem:[%s7 + $0xec] sm:$0xf]
    %v1292 = vld [vmem:[%s7 + $0xf0] sm:$0xf]
    %v1293 = vld [vmem:[%s7 + $0xf4] sm:$0xf]
    %v1294 = vld [vmem:[%s7 + $0xf8] sm:$0xf]
    %v1295 = vld [vmem:[%s7 + $0xfc] sm:$0xf]
    %v1296 = vld [vmem:[%s8] sm:$0x1]
    %v1298 = vlaneseq
    %v1299 = vshrl.u32 %v1298, 7
    %v1300 = vsub.s32 0, %v1299
    %v1301 = vrot.slane %v1296, %v1300
    %v1367 = vunpack.c.l.b16 %v1232
    %v1368 = vunpack.c.l.b16 %v1233
    %v1369 = vunpack.c.l.b16 %v1234
    %v1370 = vunpack.c.l.b16 %v1235
    %v1371 = vunpack.c.l.b16 %v1236
    %v1372 = vunpack.c.l.b16 %v1237
    %v1373 = vunpack.c.l.b16 %v1238
    %v1374 = vunpack.c.l.b16 %v1239
    %v1375 = vunpack.c.l.b16 %v1240
    %v1376 = vunpack.c.l.b16 %v1241
    %v1377 = vunpack.c.l.b16 %v1242
    %v1378 = vunpack.c.l.b16 %v1243
    %v1379 = vunpack.c.l.b16 %v1244
    %v1380 = vunpack.c.l.b16 %v1245
    %v1381 = vunpack.c.l.b16 %v1246
    %v1382 = vunpack.c.l.b16 %v1247
    %v1383 = vunpack.c.l.b16 %v1248
    %v1384 = vunpack.c.l.b16 %v1249
    %v1385 = vunpack.c.l.b16 %v1250
    %v1386 = vunpack.c.l.b16 %v1251
    %v1387 = vunpack.c.l.b16 %v1252
    %v1388 = vunpack.c.l.b16 %v1253
    %v1389 = vunpack.c.l.b16 %v1254
    %v1390 = vunpack.c.l.b16 %v1255
    %v1391 = vunpack.c.l.b16 %v1256
    %v1392 = vunpack.c.l.b16 %v1257
    %v1393 = vunpack.c.l.b16 %v1258
    %v1394 = vunpack.c.l.b16 %v1259
    %v1395 = vunpack.c.l.b16 %v1260
    %v1396 = vunpack.c.l.b16 %v1261
    %v1397 = vunpack.c.l.b16 %v1262
    %v1398 = vunpack.c.l.b16 %v1263
    %v1399 = vunpack.c.l.b16 %v1264
    %v1400 = vunpack.c.l.b16 %v1265
    %v1401 = vunpack.c.l.b16 %v1266
    %v1402 = vunpack.c.l.b16 %v1267
    %v1403 = vunpack.c.l.b16 %v1268
    %v1404 = vunpack.c.l.b16 %v1269
    %v1405 = vunpack.c.l.b16 %v1270
    %v1406 = vunpack.c.l.b16 %v1271
    %v1407 = vunpack.c.l.b16 %v1272
    %v1408 = vunpack.c.l.b16 %v1273
    %v1409 = vunpack.c.l.b16 %v1274
    %v1410 = vunpack.c.l.b16 %v1275
    %v1411 = vunpack.c.l.b16 %v1276
    %v1412 = vunpack.c.l.b16 %v1277
    %v1413 = vunpack.c.l.b16 %v1278
    %v1414 = vunpack.c.l.b16 %v1279
    %v1415 = vunpack.c.l.b16 %v1280
    %v1416 = vunpack.c.l.b16 %v1281
    %v1417 = vunpack.c.l.b16 %v1282
    %v1418 = vunpack.c.l.b16 %v1283
    %v1419 = vunpack.c.l.b16 %v1284
    %v1420 = vunpack.c.l.b16 %v1285
    %v1421 = vunpack.c.l.b16 %v1286
    %v1422 = vunpack.c.l.b16 %v1287
    %v1423 = vunpack.c.l.b16 %v1288
    %v1424 = vunpack.c.l.b16 %v1289
    %v1425 = vunpack.c.l.b16 %v1290
    %v1426 = vunpack.c.l.b16 %v1291
    %v1427 = vunpack.c.l.b16 %v1292
    %v1428 = vunpack.c.l.b16 %v1293
    %v1429 = vunpack.c.l.b16 %v1294
    %v1430 = vunpack.c.l.b16 %v1295
    %v1431 = vpack.c.b16 %v1368, %v1367
    %v1432 = vpack.c.b16 %v1370, %v1369
    %v1433 = vpack.c.b16 %v1372, %v1371
    %v1434 = vpack.c.b16 %v1374, %v1373
    %v1435 = vpack.c.b16 %v1376, %v1375
    %v1436 = vpack.c.b16 %v1378, %v1377
    %v1437 = vpack.c.b16 %v1380, %v1379
    %v1438 = vpack.c.b16 %v1382, %v1381
    %v1439 = vpack.c.b16 %v1384, %v1383
    %v1440 = vpack.c.b16 %v1386, %v1385
    %v1441 = vpack.c.b16 %v1388, %v1387
    %v1442 = vpack.c.b16 %v1390, %v1389
    %v1443 = vpack.c.b16 %v1392, %v1391
    %v1444 = vpack.c.b16 %v1394, %v1393
    %v1445 = vpack.c.b16 %v1396, %v1395
    %v1446 = vpack.c.b16 %v1398, %v1397
    %v1447 = vpack.c.b16 %v1400, %v1399
    %v1448 = vpack.c.b16 %v1402, %v1401
    %v1449 = vpack.c.b16 %v1404, %v1403
    %v1450 = vpack.c.b16 %v1406, %v1405
    %v1451 = vpack.c.b16 %v1408, %v1407
    %v1452 = vpack.c.b16 %v1410, %v1409
    %v1453 = vpack.c.b16 %v1412, %v1411
    %v1454 = vpack.c.b16 %v1414, %v1413
    %v1455 = vpack.c.b16 %v1416, %v1415
    %v1456 = vpack.c.b16 %v1418, %v1417
    %v1457 = vpack.c.b16 %v1420, %v1419
    %v1458 = vpack.c.b16 %v1422, %v1421
    %v1459 = vpack.c.b16 %v1424, %v1423
    %v1460 = vpack.c.b16 %v1426, %v1425
    %v1461 = vpack.c.b16 %v1428, %v1427
    %v1462 = vpack.c.b16 %v1430, %v1429
    %1495 = vmatprep.subr.bf16.mxu0 0
    %1496 = vmatpush1.bf16.msra.mxu0 %v1431
    %1497 = vmatprep.subr.bf16.mxu0 0
    %1498 = vmatpush1.bf16.msra.mxu0 %v1432
    %1499 = vmatprep.subr.bf16.mxu0 0
    %1500 = vmatpush1.bf16.msra.mxu0 %v1433
    %1501 = vmatprep.subr.bf16.mxu0 0
    %1502 = vmatpush1.bf16.msra.mxu0 %v1434
    %1503 = vmatprep.subr.bf16.mxu0 0
    %1504 = vmatpush1.bf16.msra.mxu0 %v1435
    %1505 = vmatprep.subr.bf16.mxu0 0
    %1506 = vmatpush1.bf16.msra.mxu0 %v1436
    %1507 = vmatprep.subr.bf16.mxu0 0
    %1508 = vmatpush1.bf16.msra.mxu0 %v1437
    %1509 = vmatprep.subr.bf16.mxu0 0
    %1510 = vmatpush1.bf16.msra.mxu0 %v1438
    %1511 = vmatprep.subr.bf16.mxu0 0
    %1512 = vmatpush1.bf16.msra.mxu0 %v1439
    %1513 = vmatprep.subr.bf16.mxu0 0
    %1514 = vmatpush1.bf16.msra.mxu0 %v1440
    %1515 = vmatprep.subr.bf16.mxu0 0
    %1516 = vmatpush1.bf16.msra.mxu0 %v1441
    %1517 = vmatprep.subr.bf16.mxu0 0
    %1518 = vmatpush1.bf16.msra.mxu0 %v1442
    %1519 = vmatprep.subr.bf16.mxu0 0
    %1520 = vmatpush1.bf16.msra.mxu0 %v1443
    %1521 = vmatprep.subr.bf16.mxu0 0
    %1522 = vmatpush1.bf16.msra.mxu0 %v1444
    %1523 = vmatprep.subr.bf16.mxu0 0
    %1524 = vmatpush1.bf16.msra.mxu0 %v1445
    %1525 = vmatprep.subr.bf16.mxu0 0
    %1526 = vmatpush1.bf16.msra.mxu0 %v1446
    %1527 = vmatprep.mubr.bf16.mxu0 %v1229
    %1528 = vmatmul.mubr.bf16.gmra.mrb[0].mxu0 %v1228
    %v1529 = vpop.f32.mrb[0].mxu0
    %v1530 = vadd.f32 %v1301, %v1529
    %v1531 = vpop.f32.mrb[0].mxu0
    %v1532 = vpop.f32.mrb[0].mxu0
    %v1533 = vadd.f32 %v1301, %v1532
    %v1534 = vpop.f32.mrb[0].mxu0
    %1535 = vdwg.mxu0
    %1536 = vmatprep.subr.bf16.mxu0 0
    %1537 = vmatpush1.bf16.msra.mxu0 %v1447
    %1538 = vmatprep.subr.bf16.mxu0 0
    %1539 = vmatpush1.bf16.msra.mxu0 %v1448
    %1540 = vmatprep.subr.bf16.mxu0 0
    %1541 = vmatpush1.bf16.msra.mxu0 %v1449
    %1542 = vmatprep.subr.bf16.mxu0 0
    %1543 = vmatpush1.bf16.msra.mxu0 %v1450
    %1544 = vmatprep.subr.bf16.mxu0 0
    %1545 = vmatpush1.bf16.msra.mxu0 %v1451
    %1546 = vmatprep.subr.bf16.mxu0 0
    %1547 = vmatpush1.bf16.msra.mxu0 %v1452
    %1548 = vmatprep.subr.bf16.mxu0 0
    %1549 = vmatpush1.bf16.msra.mxu0 %v1453
    %1550 = vmatprep.subr.bf16.mxu0 0
    %1551 = vmatpush1.bf16.msra.mxu0 %v1454
    %1552 = vmatprep.subr.bf16.mxu0 0
    %1553 = vmatpush1.bf16.msra.mxu0 %v1455
    %1554 = vmatprep.subr.bf16.mxu0 0
    %1555 = vmatpush1.bf16.msra.mxu0 %v1456
    %1556 = vmatprep.subr.bf16.mxu0 0
    %1557 = vmatpush1.bf16.msra.mxu0 %v1457
    %1558 = vmatprep.subr.bf16.mxu0 0
    %1559 = vmatpush1.bf16.msra.mxu0 %v1458
    %1560 = vmatprep.subr.bf16.mxu0 0
    %1561 = vmatpush1.bf16.msra.mxu0 %v1459
    %1562 = vmatprep.subr.bf16.mxu0 0
    %1563 = vmatpush1.bf16.msra.mxu0 %v1460
    %1564 = vmatprep.subr.bf16.mxu0 0
    %1565 = vmatpush1.bf16.msra.mxu0 %v1461
    %1566 = vmatprep.subr.bf16.mxu0 0
    %1567 = vmatpush1.bf16.msra.mxu0 %v1462
    %1568 = vmatprep.mubr.bf16.mxu0 %v1231
    %1569 = vmatmul.mubr.bf16.gmra.mrb[0].mxu0 %v1230
    %v1570 = vpop.f32.mrb[0].mxu0
    %v1571 = vadd.f32 %v1530, %v1570
    %v1572 = vpop.f32.mrb[0].mxu0
    %v1573 = vpop.f32.mrb[0].mxu0
    %v1574 = vadd.f32 %v1533, %v1573
    %v1575 = vpop.f32.mrb[0].mxu0
    %1576 = vdwg.mxu0
    %vm1577 = vcmask 64512
    %1578 = vst.msk [vmem:[%s9] sm:$0xff] %vm1577, %v1571
    %1579 = vst.msk [vmem:[%s9 + $0x8] sm:$0xff] %vm1577, %v1574
    // Predicated region
    $region46: #{dueling_dqn_forward.1} parent=1 // pred_check
      _
    $region47: #{dueling_dqn_forward.1} parent=1 // pred_check_branch
      %1581 = sbr.rel (0) target = $region49
    $region48: #{dueling_dqn_forward.1} parent=1 // pred_region
      _
    $region49: #{dueling_dqn_forward.1} parent=1 // pred_fallthru
      _
    // Predicated region
    $region50: #{dueling_dqn_forward.1} parent=1 // pred_check
      _
    $region51: #{dueling_dqn_forward.1} parent=1 // pred_check_branch
      %1583 = sbr.rel (0) target = $region53
    $region52: #{dueling_dqn_forward.1} parent=1 // pred_region
      _
    $region53: #{dueling_dqn_forward.1} parent=1 // pred_fallthru
      _
    %1584 = vsyncpa [#allocation3], 1
    %1585 = vsyncpa [#allocation5], 1

</llo_original>
